<compile_context>
chip_gen: v6e
topology: v6e:2x2x1
jax: 0.10.0
libtpu: 0.0.40
codegen_flags: <defaults>
</compile_context>

<pallas_src>
import functools

import jax
import jax.numpy as jnp
from jax.experimental import pallas as pl
from jax.experimental.pallas import tpu as pltpu


def _round_up(v: int, m: int) -> int:
    return (v + m - 1) // m * m


def _largest_aligned_divisor(dim: int, align: int, cap: int):
    """Largest multiple of `align` that divides `dim` and is <= cap (or None)."""
    best = None
    upper = min(dim, cap)
    for d in range(align, upper + 1, align):
        if dim % d == 0:
            best = d
    return best


@functools.lru_cache(maxsize=None)
def _vmem_budget_bytes() -> int:
    """~75% of physical per-TensorCore VMEM; conservative fallback = v7x (64 MiB)."""
    try:
        phys = pltpu.get_tpu_info().vmem_capacity_bytes
    except Exception:  # query unavailable -> assume the smallest generation (v7x)
        phys = 64 * 1024 * 1024
    return int(phys * 3 // 4)


def _linear_relu_kernel_fused(x_ref, w_ref, b_ref, o_ref):
    # Single-K fast path.
    # x_ref: (tm, K)   w_ref: (K, tn)   b_ref: (1, tn)   o_ref: (tm, tn)
    y = jnp.dot(x_ref[...], w_ref[...], preferred_element_type=jnp.float32)
    y = y + b_ref[...].astype(jnp.float32)
    o_ref[...] = jnp.maximum(y, 0.0).astype(o_ref.dtype)


def _linear_relu_kernel_ktiled(x_ref, w_ref, b_ref, o_ref, acc_ref):
    # K-tiled path with an f32 VMEM accumulator resident across the K axis.
    # x_ref: (tm, tk)  w_ref: (tk, tn)  b_ref: (1, tn)  o_ref/acc_ref: (tm, tn)
    k = pl.program_id(2)

    @pl.when(k == 0)
    def _init():
        acc_ref[...] = jnp.zeros_like(acc_ref)

    acc_ref[...] += jnp.dot(x_ref[...], w_ref[...],
                            preferred_element_type=jnp.float32)

    @pl.when(k == pl.num_programs(2) - 1)
    def _finalize():
        y = acc_ref[...] + b_ref[...].astype(jnp.float32)  # bias added once
        o_ref[...] = jnp.maximum(y, 0.0).astype(o_ref.dtype)


def prepare_params(weight, bias):
    """One-time layout prep at weight-load time (NOT per forward call).

    Converts a PyTorch nn.Linear weight of shape (out_features, in_features)
    to the (in_features, out_features) layout the kernel consumes, so the hot
    path has neither an HBM transpose nor in-kernel vxpose.
    """
    return jnp.asarray(weight).T, jnp.asarray(bias)


@functools.partial(jax.jit, static_argnames=("tm", "tn", "tk"))
def linear_relu(x, w_t, bias, *, tm=None, tn=None, tk=None):
    """relu(x @ w_t + bias), with w_t already in (in_features, out_features) layout.

    x:    (B, in_features)
    w_t:  (in_features, out_features)   -- from prepare_params(weight, bias)
    bias: (out_features,)
    """
    B, K = x.shape
    K_w, N = w_t.shape
    assert K_w == K, f"w_t must be (in_features, out_features); got {w_t.shape}"
    assert bias.shape == (N,)
    out_dtype = x.dtype

    in_bytes = jnp.dtype(x.dtype).itemsize
    out_bytes = jnp.dtype(out_dtype).itemsize
    budget = _vmem_budget_bytes()

    # ---------------- tile selection ----------------
    # Sublane packing of activation rows: 8 (f32), 16 (bf16), 32 (int8/fp8).
    sub_align = {1: 32, 2: 16}.get(in_bytes, 8)
    cap_m, cap_n, cap_k = 512, 1024, 2048

    if tm is None:
        if B <= cap_m:
            tm = B                                       # full-dim block, no pad
        elif B % cap_m == 0:
            tm = cap_m
        else:
            tm = _largest_aligned_divisor(B, sub_align, cap_m) or cap_m

    if tn is None:
        if N <= cap_n:
            tn = N                                       # full-dim block, no pad
        else:
            tn = (_largest_aligned_divisor(N, 256, cap_n)
                  or _largest_aligned_divisor(N, 128, cap_n)
                  or cap_n)
        # Megacore (v7x has 2 TensorCores): if the parallel grid would be 1x1,
        # split N -- but only when the split introduces no padding.
        if tm >= B and tn >= N:
            tn_split = _largest_aligned_divisor(N, 128, N // 2) if N >= 256 else None
            if tn_split is not None:
                tn = tn_split

    if tk is None:
        # Single-K fast path when double-buffered x / w_t / bias tiles plus the
        # double-buffered output tile fit the per-generation VMEM budget.
        fast_need = (2 * (tm * K + K * tn + tn) * in_bytes
                     + 2 * tm * tn * out_bytes)
        if fast_need <= budget:
            tk = K
        else:
            tk = (_largest_aligned_divisor(K, 256, cap_k)
                  or _largest_aligned_divisor(K, 128, cap_k)
                  or min(cap_k, _round_up(K, 128)))

    # ---------------- validate tiles against TPU tiling constraints ----------------
    assert tm == B or tm % sub_align == 0, \
        f"tm={tm} must equal B or be a multiple of {sub_align} for this dtype"
    assert tn == N or tn % 128 == 0, \
        f"tn={tn} must equal out_features or be a multiple of 128"
    assert tk == K or tk % 128 == 0, \
        f"tk={tk} must equal in_features or be a multiple of 128"

    # ---------------- pad only when the tiles do not divide the dims ----------------
    Mp, Np, Kp = _round_up(B, tm), _round_up(N, tn), _round_up(K, tk)
    if (Mp - B) or (Kp - K):
        x = jnp.pad(x, ((0, Mp - B), (0, Kp - K)))          # zero K-pad is exact
    if (Kp - K) or (Np - N):
        w_t = jnp.pad(w_t, ((0, Kp - K), (0, Np - N)))
    b2 = bias.reshape(1, N)
    if Np - N:
        b2 = jnp.pad(b2, ((0, 0), (0, Np - N)))

    gm, gn, gk = Mp // tm, Np // tn, Kp // tk

    cost = pl.CostEstimate(
        flops=2 * B * K * N,
        transcendentals=0,
        bytes_accessed=(B * K + K * N + N) * in_bytes + B * N * out_bytes,
    )

    if gk == 1:
        # ---- fused single-K kernel: no accumulator, purely parallel 2-D grid ----
        vmem_need = (2 * (tm * Kp + Kp * tn + tn) * in_bytes
                     + 2 * tm * tn * out_bytes)
        grid_spec = pltpu.PrefetchScalarGridSpec(
            num_scalar_prefetch=0,
            grid=(gm, gn),
            in_specs=[
                pl.BlockSpec((tm, Kp), lambda i, j: (i, 0)),     # x
                pl.BlockSpec((Kp, tn), lambda i, j: (0, j)),     # w_t
                pl.BlockSpec((1, tn), lambda i, j: (0, j)),      # bias (N-tiled)
            ],
            out_specs=pl.BlockSpec((tm, tn), lambda i, j: (i, j)),
            scratch_shapes=[],
        )
        kernel = _linear_relu_kernel_fused
        semantics = ("parallel", "parallel")
    else:
        # ---- K-tiled kernel: K innermost ("arbitrary"), f32 accumulator ----
        vmem_need = (2 * (tm * tk + tk * tn + tn) * in_bytes
                     + tm * tn * 4
                     + 2 * tm * tn * out_bytes)
        grid_spec = pltpu.PrefetchScalarGridSpec(
            num_scalar_prefetch=0,
            grid=(gm, gn, gk),
            in_specs=[
                pl.BlockSpec((tm, tk), lambda i, j, k: (i, k)),  # x
                pl.BlockSpec((tk, tn), lambda i, j, k: (k, j)),  # w_t
                pl.BlockSpec((1, tn), lambda i, j, k: (0, j)),   # bias (N-tiled)
            ],
            out_specs=pl.BlockSpec((tm, tn), lambda i, j, k: (i, j)),
            scratch_shapes=[pltpu.VMEM((tm, tn), jnp.float32)],
        )
        kernel = _linear_relu_kernel_ktiled
        semantics = ("parallel", "parallel", "arbitrary")

    # Clamp the scoped-VMEM hint to the per-generation budget (<= ~75% physical).
    vmem_limit = int(min(budget, max(vmem_need * 3 // 2, 16 * 1024 * 1024)))

    out = pl.pallas_call(
        kernel,
        out_shape=jax.ShapeDtypeStruct((Mp, Np), out_dtype),
        grid_spec=grid_spec,
        compiler_params=pltpu.CompilerParams(
            dimension_semantics=semantics,
            vmem_limit_bytes=vmem_limit,
        ),
        cost_estimate=cost,
    )(x, w_t, b2)

    if (Mp, Np) != (B, N):
        out = out[:B, :N]
    return out


if __name__ == "__main__":
    # LinearReLU(in_features=32, out_features=64) on a small batch.
    batch, in_features, out_features = 8, 32, 64

    key = jax.random.PRNGKey(0)
    kx, kw, kb = jax.random.split(key, 3)

    x = jax.random.normal(kx, (batch, in_features), dtype=jnp.float32)
    bound = 1.0 / (in_features ** 0.5)  # PyTorch nn.Linear default init scale
    weight = jax.random.uniform(kw, (out_features, in_features),
                                dtype=jnp.float32, minval=-bound, maxval=bound)
    bias = jax.random.uniform(kb, (out_features,),
                              dtype=jnp.float32, minval=-bound, maxval=bound)

    # One-time weight-layout prep (not on the per-call hot path).
    w_t, b = prepare_params(weight, bias)

    out = linear_relu(x, w_t, b)                 # fast path: grid (1, 1), fused
    jax.block_until_ready(out)
    ref = jnp.maximum(x @ weight.T + bias, 0.0)
    assert out.shape == (batch, out_features)
    assert jnp.allclose(out, ref, atol=1e-5, rtol=1e-5)

    # Multi-block / K-tiled (accumulator) path, divisor tiles -> no padding.
    B2, I2, O2 = 64, 512, 384
    k1, k2, k3 = jax.random.split(jax.random.PRNGKey(1), 3)
    x2 = jax.random.normal(k1, (B2, I2), dtype=jnp.float32)
    w2 = jax.random.normal(k2, (O2, I2), dtype=jnp.float32) * 0.05
    b2v = jax.random.normal(k3, (O2,), dtype=jnp.float32) * 0.05
    w2_t, b2p = prepare_params(w2, b2v)
    out2 = linear_relu(x2, w2_t, b2p, tm=64, tn=128, tk=256)
    jax.block_until_ready(out2)
    ref2 = jnp.maximum(x2 @ w2.T + b2v, 0.0)
    assert jnp.allclose(out2, ref2, atol=1e-4, rtol=1e-4)

    # Ragged shape exercising the guarded padding + output-slicing path.
    B3, I3, O3 = 10, 200, 72
    k4, k5, k6 = jax.random.split(jax.random.PRNGKey(2), 3)
    x3 = jax.random.normal(k4, (B3, I3), dtype=jnp.float32)
    w3 = jax.random.normal(k5, (O3, I3), dtype=jnp.float32) * 0.05
    b3v = jax.random.normal(k6, (O3,), dtype=jnp.float32) * 0.05
    w3_t, b3p = prepare_params(w3, b3v)
    out3 = linear_relu(x3, w3_t, b3p, tm=16, tn=128, tk=128)
    jax.block_until_ready(out3)
    ref3 = jnp.maximum(x3 @ w3.T + b3v, 0.0)
    assert jnp.allclose(out3, ref3, atol=1e-4, rtol=1e-4)

    print("KERNEL_OK")
</pallas_src>

<mosaic_0001>
module attributes {stable_mosaic.version = 11 : i64} {
  func.func @_linear_relu_kernel_fused(%arg0: i32, %arg1: i32, %arg2: memref<8x32xf32, #tpu.memory_space<vmem>>, %arg3: memref<32x64xf32, #tpu.memory_space<vmem>>, %arg4: memref<1x64xf32, #tpu.memory_space<vmem>>, %arg5: memref<8x64xf32, #tpu.memory_space<vmem>>) attributes {dimension_semantics = [#tpu.dimension_semantics<parallel>, #tpu.dimension_semantics<parallel>], iteration_bounds = array<i64: 1, 1>, scalar_prefetch = 0 : i64, scratch_operands = 0 : i64, tpu.core_type = #tpu.core_type<tc>, window_params = [{transform_indices = @transform_0, window_bounds = array<i64: 8, 32>}, {transform_indices = @transform_1, window_bounds = array<i64: 32, 64>}, {transform_indices = @transform_2, window_bounds = array<i64: 1, 64>}, {transform_indices = @transform_3, window_bounds = array<i64: 8, 64>}]} {
    %c0 = arith.constant 0 : index
    %c0_0 = arith.constant 0 : index
    %0 = vector.load %arg2[%c0, %c0_0] : memref<8x32xf32, #tpu.memory_space<vmem>>, vector<8x32xf32>
    %c0_1 = arith.constant 0 : index
    %c0_2 = arith.constant 0 : index
    %1 = vector.load %arg3[%c0_1, %c0_2] : memref<32x64xf32, #tpu.memory_space<vmem>>, vector<32x64xf32>
    %cst = arith.constant dense<0.000000e+00> : vector<8x64xf32>
    %2 = tpu.matmul %0, %1, %cst {dimension_numbers = #tpu.dot_dimension_numbers<[1], [0], [0], [1], [0, 0, 1, 1], [], []>} : vector<8x32xf32>, vector<32x64xf32>, vector<8x64xf32> -> vector<8x64xf32>
    %c0_3 = arith.constant 0 : index
    %c0_4 = arith.constant 0 : index
    %3 = vector.load %arg4[%c0_3, %c0_4] : memref<1x64xf32, #tpu.memory_space<vmem>>, vector<1x64xf32>
    %4 = vector.broadcast %3 : vector<1x64xf32> to vector<8x64xf32>
    %5 = arith.addf %2, %4 : vector<8x64xf32>
    %cst_5 = arith.constant 0.000000e+00 : f32
    %6 = vector.broadcast %cst_5 : f32 to vector<8x64xf32>
    %7 = arith.maximumf %5, %6 : vector<8x64xf32>
    %c0_6 = arith.constant 0 : index
    %c0_7 = arith.constant 0 : index
    %8 = vector.load %arg5[%c0_6, %c0_7] : memref<8x64xf32, #tpu.memory_space<vmem>>, vector<8x64xf32>
    tpu.vector_store %arg5[%c0_6, %c0_7], %7 {strides = array<i32>} : memref<8x64xf32, #tpu.memory_space<vmem>>, vector<8x64xf32>,
    return
  }
  func.func @transform_0(%arg0: i32, %arg1: i32) -> (i32, i32) {
    %c0_i32 = arith.constant 0 : i32
    %c0_i32_0 = arith.constant 0 : i32
    return %arg0, %c0_i32 : i32, i32
  }
  func.func @transform_1(%arg0: i32, %arg1: i32) -> (i32, i32) {
    %c0_i32 = arith.constant 0 : i32
    %c0_i32_0 = arith.constant 0 : i32
    return %c0_i32, %arg1 : i32, i32
  }
  func.func @transform_2(%arg0: i32, %arg1: i32) -> (i32, i32) {
    %c0_i32 = arith.constant 0 : i32
    %c0_i32_0 = arith.constant 0 : i32
    return %c0_i32, %arg1 : i32, i32
  }
  func.func @transform_3(%arg0: i32, %arg1: i32) -> (i32, i32) {
    %c0_i32 = arith.constant 0 : i32
    return %arg0, %arg1 : i32, i32
  }
}

</mosaic_0001>

<llo_original>
// kernel: linear_relu.1
$region0: #{linear_relu.1}
  #allocation0 [shape = 'u32[]', space=smem, size = 0x4, offset = 0x4, fixed_abs, tag = 'smem constant byte address 0x4 - core index']
  #allocation1 [shape = 'u32[144,128]{1,0:T(1,128)}', space=vmem, size = 0x12000, scoped, tag = 'internal scratch']
  %s0 = inlined_call_operand.hbm [shape: f32[8,32], index: 0, kind: input, shape index: {}]
  %s1 = inlined_call_operand.hbm [shape: f32[32,64], index: 1, kind: input, shape index: {}]
  %s2 = inlined_call_operand.vmem [shape: f32[1,64], index: 2, kind: input, shape index: {}]
  %s3 = inlined_call_operand.hbm [shape: f32[8,64], index: 3, kind: output, shape index: {}]
  %s4 = sld [smem:[#allocation0]]
  $region30: #{linear_relu.1} parent=0
    _
  %s6 = ssub.s32 1, %s4
  %s7 = scalar_select 0, %s6, %s4
  $region1: #{linear_relu.1} parent=0
    #allocation2 [shape = 'u8[4096]{0}', space=vmem, size = 0x1000, scoped, tag = 'input window, operand 0, single buffered']
    #allocation3 [shape = 's32[1]{0}', space=sflag, size = 0x4, scoped, tag = 'scoped memory for linear_relu.1']
    #allocation4 [shape = 's32[1]{0}', space=sflag, size = 0x4, scoped, tag = 'scoped memory for linear_relu.1']
    #allocation5 [shape = 'u8[16384]{0}', space=vmem, size = 0x4000, scoped, tag = 'input window, operand 1, single buffered']
    #allocation6 [shape = 's32[1]{0}', space=sflag, size = 0x4, scoped, tag = 'scoped memory for linear_relu.1']
    #allocation7 [shape = 'u8[4096]{0}', space=vmem, size = 0x1000, scoped, tag = 'output window, operand 0, single buffered']
    %8 = vsyncpa [#allocation3], 0
    %9 = vsyncpa [#allocation6], 0
    %10 = vsyncpa [#allocation4], 0
    // Predicated region
    $region2: #{linear_relu.1} parent=1 // pred_check
      _
    $region3: #{linear_relu.1} parent=1 // pred_check_branch
      %12 = sbr.rel (0) target = $region5
    $region4: #{linear_relu.1} parent=1 // pred_region
      %s14 = ssub.s32 128, 128
      %15 = vsyncadd [#allocation3], %s14
      %s17 = sshll.u32 [#allocation2], 4
      %s18 = int_to_ptr.vmem [resolvable:$true] %s17
      %20 = dma.hbm_to_vmem [thread:$0]  %s0, 128, %s18, [#allocation3]
    $region5: #{linear_relu.1} parent=1 // pred_fallthru
      _
    // Predicated region
    $region6: #{linear_relu.1} parent=1 // pred_check
      _
    $region7: #{linear_relu.1} parent=1 // pred_check_branch
      %22 = sbr.rel (0) target = $region9
    $region8: #{linear_relu.1} parent=1 // pred_region
      %s24 = ssub.s32 512, 512
      %25 = vsyncadd [#allocation6], %s24
      %s26 = sshll.u32 [#allocation5], 4
      %s27 = int_to_ptr.vmem [resolvable:$true] %s26
      %32 = dma.hbm_to_vmem [thread:$0]  %s1, 512, %s27, [#allocation6], 128, 128, 8
    $region9: #{linear_relu.1} parent=1 // pred_fallthru
      _
    // Predicated region
    $region10: #{linear_relu.1} parent=1 // pred_check
      _
    $region11: #{linear_relu.1} parent=1 // pred_check_branch
      %34 = sbr.rel (0) target = $region13
    $region12: #{linear_relu.1} parent=1 // pred_region
      _
    $region13: #{linear_relu.1} parent=1 // pred_fallthru
      _
    // Predicated region
    $region14: #{linear_relu.1} parent=1 // pred_check
      _
    $region15: #{linear_relu.1} parent=1 // pred_check_branch
      %36 = sbr.rel (0) target = $region17
    $region16: #{linear_relu.1} parent=1 // pred_region
      %37 = dma.done [#allocation3], 128
    $region17: #{linear_relu.1} parent=1 // pred_fallthru
      _
    // Predicated region
    $region18: #{linear_relu.1} parent=1 // pred_check
      _
    $region19: #{linear_relu.1} parent=1 // pred_check_branch
      %39 = sbr.rel (0) target = $region21
    $region20: #{linear_relu.1} parent=1 // pred_region
      %40 = dma.done [#allocation6], 512
    $region21: #{linear_relu.1} parent=1 // pred_fallthru
      _
    %v41 = vld [vmem:[#allocation2] sm:$0xff]
    %v42 = vld [vmem:[#allocation5] sm:$0xff]
    %v43 = vld [vmem:[#allocation5 + $0x8] sm:$0xff]
    %v44 = vld [vmem:[#allocation5 + $0x10] sm:$0xff]
    %v45 = vld [vmem:[#allocation5 + $0x18] sm:$0xff]
    %v46 = vld [vmem:[%s2] sm:$0x1]
    %v48 = vlaneseq
    %v49 = vshrl.u32 %v48, 7
    %v50 = vsub.s32 0, %v49
    %v51 = vrot.slane %v46, %v50
    %vm53 = vcmask 261120
    %v55 = vsel %vm53, %v41, 0
    %57 = vmatprep.subr.mxu0 0.0
    %58 = vmatpush1.msra.mxu0 0.0
    %59 = vmatprep.subr.mxu0 0.0
    %60 = vmatpush1.msra.mxu0 0.0
    %61 = vmatprep.subr.mxu0 0.0
    %62 = vmatpush1.msra.mxu0 0.0
    %63 = vmatprep.subr.mxu0 0.0
    %64 = vmatpush1.msra.mxu0 0.0
    %65 = vmatprep.subr.mxu0 0.0
    %66 = vmatpush1.msra.mxu0 0.0
    %67 = vmatprep.subr.mxu0 0.0
    %68 = vmatpush1.msra.mxu0 0.0
    %69 = vmatprep.subr.mxu0 0.0
    %70 = vmatpush1.msra.mxu0 0.0
    %71 = vmatprep.subr.mxu0 0.0
    %72 = vmatpush1.msra.mxu0 0.0
    %73 = vmatprep.subr.mxu0 0.0
    %74 = vmatpush1.msra.mxu0 0.0
    %75 = vmatprep.subr.mxu0 0.0
    %76 = vmatpush1.msra.mxu0 0.0
    %77 = vmatprep.subr.mxu0 0.0
    %78 = vmatpush1.msra.mxu0 0.0
    %79 = vmatprep.subr.mxu0 0.0
    %80 = vmatpush1.msra.mxu0 0.0
    %81 = vmatprep.subr.mxu0 0.0
    %82 = vmatpush1.msra.mxu0 %v45
    %83 = vmatprep.subr.mxu0 0.0
    %84 = vmatpush1.msra.mxu0 %v44
    %85 = vmatprep.subr.mxu0 0.0
    %86 = vmatpush1.msra.mxu0 %v43
    %87 = vmatprep.subr.mxu0 0.0
    %88 = vmatpush1.msra.mxu0 %v42
    %89 = vmatprep.subr.mxu0 0.0
    %90 = vmatpush2.msra.mxu0 0.0
    %91 = vmatprep.subr.mxu0 0.0
    %92 = vmatpush2.msra.mxu0 0.0
    %93 = vmatprep.subr.mxu0 0.0
    %94 = vmatpush2.msra.mxu0 0.0
    %95 = vmatprep.subr.mxu0 0.0
    %96 = vmatpush2.msra.mxu0 0.0
    %97 = vmatprep.subr.mxu0 0.0
    %98 = vmatpush2.msra.mxu0 0.0
    %99 = vmatprep.subr.mxu0 0.0
    %100 = vmatpush2.msra.mxu0 0.0
    %101 = vmatprep.subr.mxu0 0.0
    %102 = vmatpush2.msra.mxu0 0.0
    %103 = vmatprep.subr.mxu0 0.0
    %104 = vmatpush2.msra.mxu0 0.0
    %105 = vmatprep.subr.mxu0 0.0
    %106 = vmatpush2.msra.mxu0 0.0
    %107 = vmatprep.subr.mxu0 0.0
    %108 = vmatpush2.msra.mxu0 0.0
    %109 = vmatprep.subr.mxu0 0.0
    %110 = vmatpush2.msra.mxu0 0.0
    %111 = vmatprep.subr.mxu0 0.0
    %112 = vmatpush2.msra.mxu0 0.0
    %113 = vmatprep.subr.mxu0 0.0
    %114 = vmatpush2.msra.mxu0 0.0
    %115 = vmatprep.subr.mxu0 0.0
    %116 = vmatpush2.msra.mxu0 0.0
    %117 = vmatprep.subr.mxu0 0.0
    %118 = vmatpush2.msra.mxu0 0.0
    %119 = vmatprep.subr.mxu0 0.0
    %120 = vmatpush2.msra.mxu0 0.0
    %121 = vmatprep.mubr.f32.mxu0 0.0
    %122 = vmatmul.mubr.f32.gmra.mxu0 %v55
    %v123 = vpop.f32.mrf.mxu0
    %v124 = vadd.f32 %v51, %v123
    %v125 = vpop.f32.mrf.mxu0
    %126 = vdwg.mxu0
    %v127 = vmax.f32 %v124, 0.0
    %vm128 = vcmask 523264
    %129 = vst.msk [vmem:[#allocation7] sm:$0xff] %vm128, %v127
    // Predicated region
    $region22: #{linear_relu.1} parent=1 // pred_check
      _
    $region23: #{linear_relu.1} parent=1 // pred_check_branch
      %131 = sbr.rel (0) target = $region25
    $region24: #{linear_relu.1} parent=1 // pred_region
      %s133 = ssub.s32 128, 128
      %134 = vsyncadd [#allocation4], %s133
      %s136 = sshll.u32 [#allocation7], 4
      %s137 = int_to_ptr.vmem [resolvable:$true] %s136
      %139 = dma.vmem_to_hbm [thread:$0]  %s137, 128, %s3, [#allocation4]
    $region25: #{linear_relu.1} parent=1 // pred_fallthru
      _
    // Predicated region
    $region26: #{linear_relu.1} parent=1 // pred_check
      _
    $region27: #{linear_relu.1} parent=1 // pred_check_branch
      %141 = sbr.rel (0) target = $region29
    $region28: #{linear_relu.1} parent=1 // pred_region
      %142 = dma.done [#allocation4], 128
    $region29: #{linear_relu.1} parent=1 // pred_fallthru
      _
    %143 = vsyncpa [#allocation3], 1
    %144 = vsyncpa [#allocation6], 1
    %145 = vsyncpa [#allocation4], 1

</llo_original>
